<compile_context>
chip_gen: v7x
topology: tpu7x:2x2x1
jax: 0.10.0
libtpu: 0.0.40
codegen_flags: <defaults>
</compile_context>

<pallas_src>
import functools

import numpy as np

import jax
import jax.numpy as jnp
from jax import lax
from jax.experimental import pallas as pl
from jax.experimental.pallas import tpu as pltpu

_LANE = 128


def _round_up(x, m):
    return ((x + m - 1) // m) * m


def _padded_row_bytes(width, itemsize):
    # A (tile_n, width) buffer is lane-padded to a multiple of 128 in VMEM.
    return _round_up(max(int(width), 1), _LANE) * int(itemsize)


def _tpu_vmem_capacity_bytes():
    """Physical per-core VMEM; conservative (v7x-sized) fallback if unknown."""
    try:
        info = pltpu.get_tpu_info()
        for name in ("vmem_capacity_bytes", "vmem_size_bytes", "vmem_bytes"):
            v = getattr(info, name, None)
            if v:
                return int(v)
    except Exception:
        pass
    return 64 * 1024 * 1024


def _cls_loss_kernel(block_map_ref, predy_ref, target_ref, mu_ref, logvar_ref,
                     out_ref, *, n_total, loss_power):
    """One grid step: reduce a (tile_n, C)/(tile_n, D) slab to two partial sums."""
    del block_map_ref  # only consumed by the index_maps (scalar prefetch)
    tile_n, c = predy_ref.shape

    i = pl.program_id(0)            # core-split axis ("parallel", size <= 2)
    j = pl.program_id(1)            # streaming/accumulation axis ("arbitrary")
    bps = pl.num_programs(1)

    # Unclamped logical block id.  Duplicate (clamped) DMA blocks and the ragged
    # tail of the last real block both fall out of `valid` below.
    block_lin = i * bps + j
    base = block_lin * tile_n
    rows = base + lax.broadcasted_iota(jnp.int32, (tile_n, 1), 0)
    valid = rows < n_total                                      # [tile_n, 1]

    # ----- focal cross-entropy over the (tile_n, C) logits tile -----
    logits = predy_ref[...].astype(jnp.float32)
    m = jnp.max(logits, axis=-1, keepdims=True)
    shifted = logits - m
    e = jnp.exp(shifted)
    sum_e = jnp.sum(e, axis=-1, keepdims=True)

    tgt = target_ref[...]                                       # [tile_n, 1] int32
    cls_ids = lax.broadcasted_iota(jnp.int32, (1, c), 1)        # lane iota, no
    onehot = cls_ids == tgt                                     # full-tile iota
    tgt_shift = jnp.sum(jnp.where(onehot, shifted, 0.0), axis=-1, keepdims=True)

    logp = jnp.log(sum_e) - tgt_shift                           # per-sample CE
    prob = jnp.exp(-logp)
    one_minus_p = 1.0 - prob
    if float(loss_power) == int(loss_power) and int(loss_power) >= 0:
        # Integer exponent: pure VPU multiplies, numerically safe.
        focal_w = lax.integer_pow(one_minus_p, int(loss_power))
    else:
        # General float exponent: guard prob == 1 (one_minus_p <= 0) so we never
        # evaluate log(0) / 0**p -> NaN on a valid row.
        log_base = jnp.log(jnp.maximum(one_minus_p, jnp.float32(1e-30)))
        focal_w = jnp.where(one_minus_p > 0.0,
                            jnp.exp(jnp.float32(loss_power) * log_base),
                            jnp.zeros_like(one_minus_p))
    focal = focal_w * logp
    # Select-based masking (NOT multiplicative): tail/duplicate rows can hold
    # garbage (NaN/Inf) that a multiply would propagate.
    focal_sum = jnp.sum(jnp.where(valid, focal, 0.0))

    # ----- KL term over the (tile_n, D) mu / logvar tiles -----
    mu = mu_ref[...].astype(jnp.float32)
    lv = logvar_ref[...].astype(jnp.float32)
    kl = (mu * mu + jnp.exp(lv) - lv - 1.0) * 0.5
    kl_rows = jnp.sum(kl, axis=-1, keepdims=True)               # [tile_n, 1]
    kl_sum = jnp.sum(jnp.where(valid, kl_rows, 0.0))

    # ----- accumulate into the VMEM-resident (8, 128) output block -----
    # sublane 0 carries the focal sum, sublanes 1..7 carry the KL sum.
    row_id = lax.broadcasted_iota(jnp.int32, (8, 128), 0)
    partial = jnp.where(row_id == 0, focal_sum, kl_sum)

    @pl.when(j == 0)
    def _init():
        out_ref[0] = partial

    @pl.when(j > 0)
    def _acc():
        out_ref[0] = out_ref[0] + partial


def cls_loss(predy, target, mu, logvar, *, loss_power=2.0, kl_lambda=0.01,
             tile_n=None):
    """Scalar loss matching ClsLoss(loss_mode='focal_loss') forward."""
    n, c = predy.shape
    _, d = mu.shape
    target2d = target.astype(jnp.int32).reshape(n, 1)

    # --- honest per-row VMEM accounting (lane-padded) ---
    c_row_in = _padded_row_bytes(c, predy.dtype.itemsize)       # logits input buf
    c_row_f32 = _padded_row_bytes(c, 4)                         # f32 (tile_n, C) pass
    d_row_in = _padded_row_bytes(d, mu.dtype.itemsize)          # mu/logvar input buf
    d_row_f32 = _padded_row_bytes(d, 4)                         # f32 (tile_n, D) pass
    col_row = _padded_row_bytes(1, 4)                           # (tile_n, 1) column
    bytes_per_row = (
        2 * c_row_in                 # predy, double-buffered
        + 2 * col_row                # int32 label column, double-buffered
        + 2 * 2 * d_row_in           # mu + logvar, double-buffered
        + 3 * c_row_f32              # f32 upcast, (logits - m), exp tile
        + 3 * d_row_f32              # f32 mu, f32 logvar, kl tile
        + 8 * col_row                # live (tile_n, 1) f32 intermediates
    )

    # --- generation-aware budgets ---
    vmem_phys = _tpu_vmem_capacity_bytes()
    if vmem_phys >= 96 * 1024 * 1024:      # v5e / v6e class (128 MiB VMEM)
        input_budget = 56 * 1024 * 1024
        vmem_cap = 64 * 1024 * 1024
    else:                                   # v7x class (64 MiB physical) / unknown
        input_budget = 22 * 1024 * 1024
        vmem_cap = 32 * 1024 * 1024

    if tile_n is None:
        tile_n = input_budget // bytes_per_row
        tile_n = max(8, min(8192, (int(tile_n) // 8) * 8))
    tile_n = int(min(tile_n, _round_up(n, 8)))
    tile_n = max(8, tile_n - tile_n % 8)

    num_blocks = pl.cdiv(n, tile_n)
    n_split = 2 if num_blocks >= 2 else 1           # dual-TC split on v7x
    bps = pl.cdiv(num_blocks, n_split)              # blocks per split

    # Clamped block map (scalar prefetch) so the rectangular (n_split, bps) grid
    # never DMAs past the last real block; the duplicate cell is masked in-kernel.
    block_map = jnp.asarray(
        np.minimum(np.arange(n_split * bps, dtype=np.int32), num_blocks - 1))

    required = tile_n * bytes_per_row + 4 * 1024 * 1024
    vmem_limit = int(min(vmem_cap, max(8 * 1024 * 1024, required)))

    kernel = functools.partial(
        _cls_loss_kernel, n_total=n, loss_power=float(loss_power))

    def data_map(i, j, bm):
        return (bm[i * bps + j], 0)

    partials = pl.pallas_call(
        kernel,
        out_shape=jax.ShapeDtypeStruct((n_split, 8, 128), jnp.float32),
        grid_spec=pltpu.PrefetchScalarGridSpec(
            num_scalar_prefetch=1,
            grid=(n_split, bps),
            in_specs=[
                pl.BlockSpec((tile_n, c), data_map),    # predy
                pl.BlockSpec((tile_n, 1), data_map),    # target
                pl.BlockSpec((tile_n, d), data_map),    # mu
                pl.BlockSpec((tile_n, d), data_map),    # logvar
            ],
            out_specs=pl.BlockSpec((1, 8, 128), lambda i, j, bm: (i, 0, 0)),
        ),
        compiler_params=pltpu.CompilerParams(
            dimension_semantics=("parallel", "arbitrary"),
            vmem_limit_bytes=vmem_limit),
    )(block_map, predy, target2d, mu, logvar)

    focal_total = jnp.sum(partials[:, 0, 0])
    kl_total = jnp.sum(partials[:, 1, 0])
    return focal_total / n + kl_lambda * (kl_total / n)


def _reference(predy, target, mu, logvar, loss_power=2.0, kl_lambda=0.01):
    # Pure-JAX reference (same f32 upcast contract as the kernel).
    logits = predy.astype(jnp.float32)
    lse = jax.scipy.special.logsumexp(logits, axis=-1)
    tgt_logit = jnp.take_along_axis(logits, target[:, None], axis=-1)[:, 0]
    logp = lse - tgt_logit
    prob = jnp.exp(-logp)
    ce = jnp.mean(((1.0 - prob) ** loss_power) * logp)
    mu32 = mu.astype(jnp.float32)
    lv32 = logvar.astype(jnp.float32)
    kl = -(1.0 + lv32 - mu32 ** 2 - jnp.exp(lv32)) / 2.0
    kl = jnp.mean(jnp.sum(kl, axis=1))
    return ce + kl_lambda * kl


if __name__ == "__main__":
    key = jax.random.PRNGKey(0)
    k1, k2, k3, k4 = jax.random.split(key, 4)

    # --- test 1: small f32 case, single block, budget-derived tile ---
    N, C, D = 8, 16, 32          # batch, num_classes, latent dim
    predy = jax.random.normal(k1, (N, C), dtype=jnp.float32)
    target = jax.random.randint(k2, (N,), 0, C, dtype=jnp.int32)
    mu = 0.1 * jax.random.normal(k3, (N, D), dtype=jnp.float32)
    logvar = 0.1 * jax.random.normal(k4, (N, D), dtype=jnp.float32)

    loss = jax.block_until_ready(
        cls_loss(predy, target, mu, logvar, loss_power=2.0, kl_lambda=0.01))
    ref = _reference(predy, target, mu, logvar, 2.0, 0.01)
    assert jnp.allclose(loss, ref, rtol=1e-5, atol=1e-5), (loss, ref)

    # --- test 2: N not a multiple of the tile -> 2-axis grid, clamped block map,
    #             accumulator output, tail mask ---
    N2 = 37
    predy2 = jax.random.normal(k1, (N2, C), dtype=jnp.float32)
    target2 = jax.random.randint(k2, (N2,), 0, C, dtype=jnp.int32)
    mu2 = 0.1 * jax.random.normal(k3, (N2, D), dtype=jnp.float32)
    logvar2 = 0.1 * jax.random.normal(k4, (N2, D), dtype=jnp.float32)

    loss2 = jax.block_until_ready(
        cls_loss(predy2, target2, mu2, logvar2,
                 loss_power=2.0, kl_lambda=0.01, tile_n=16))
    ref2 = _reference(predy2, target2, mu2, logvar2, 2.0, 0.01)
    assert jnp.allclose(loss2, ref2, rtol=1e-5, atol=1e-5), (loss2, ref2)

    # --- test 3: bf16 inputs accepted at the boundary (halved HBM traffic) ---
    loss3 = jax.block_until_ready(
        cls_loss(predy2.astype(jnp.bfloat16), target2,
                 mu2.astype(jnp.bfloat16), logvar2.astype(jnp.bfloat16),
                 loss_power=2.0, kl_lambda=0.01, tile_n=16))
    ref3 = _reference(predy2.astype(jnp.bfloat16), target2,
                      mu2.astype(jnp.bfloat16), logvar2.astype(jnp.bfloat16),
                      2.0, 0.01)
    assert jnp.allclose(loss3, ref3, rtol=1e-4, atol=1e-4), (loss3, ref3)

    # --- test 4: non-integer loss_power exercises the NaN-guarded float path ---
    loss4 = jax.block_until_ready(
        cls_loss(predy2, target2, mu2, logvar2,
                 loss_power=1.5, kl_lambda=0.05, tile_n=16))
    ref4 = _reference(predy2, target2, mu2, logvar2, 1.5, 0.05)
    assert jnp.allclose(loss4, ref4, rtol=1e-5, atol=1e-5), (loss4, ref4)

    # TODO(synk): the DULResNet conv backbone (layer0-4 / SE blocks) and the
    # mu_head / logvar_head Linear+BN stacks are not implemented here; this
    # kernel covers the focal-loss + KL objective used to train the dul_cls
    # model.  The 'hardmining' ClsLoss branch references undefined names in the
    # reference repo and is likewise not implemented.
    print("KERNEL_OK")
</pallas_src>

<mosaic_0001>
module attributes {stable_mosaic.version = 11 : i64} {
  func.func @_cls_loss_kernel(%arg0: i32, %arg1: i32, %arg2: memref<1xi32, #tpu.memory_space<smem>>, %arg3: memref<8x16xf32, #tpu.memory_space<vmem>>, %arg4: memref<8x1xi32, #tpu.memory_space<vmem>>, %arg5: memref<8x32xf32, #tpu.memory_space<vmem>>, %arg6: memref<8x32xf32, #tpu.memory_space<vmem>>, %arg7: memref<1x8x128xf32, #tpu.memory_space<vmem>>) attributes {dimension_semantics = [#tpu.dimension_semantics<parallel>, #tpu.dimension_semantics<arbitrary>], iteration_bounds = array<i64: 1, 1>, scalar_prefetch = 1 : i64, scratch_operands = 0 : i64, tpu.core_type = #tpu.core_type<tc>, window_params = [{transform_indices = @transform_0, window_bounds = array<i64: 8, 16>}, {transform_indices = @transform_1, window_bounds = array<i64: 8, 1>}, {transform_indices = @transform_2, window_bounds = array<i64: 8, 32>}, {transform_indices = @transform_3, window_bounds = array<i64: 8, 32>}, {transform_indices = @transform_4, window_bounds = array<i64: 1, 8, 128>}]} {
    %c1_i32 = arith.constant 1 : i32
    %0 = arith.muli %arg0, %c1_i32 : i32
    %1 = arith.addi %0, %arg1 : i32
    %c8_i32 = arith.constant 8 : i32
    %2 = arith.muli %1, %c8_i32 : i32
    %3 = tpu.iota {dimensions = array<i32: 0>} : vector<8x1xi32>
    %4 = vector.broadcast %2 : i32 to vector<8x1xi32>
    %5 = arith.addi %4, %3 : vector<8x1xi32>
    %c8_i32_0 = arith.constant 8 : i32
    %6 = vector.broadcast %c8_i32_0 : i32 to vector<8x1xi32>
    %7 = arith.cmpi slt, %5, %6 : vector<8x1xi32>
    %c0 = arith.constant 0 : index
    %c0_1 = arith.constant 0 : index
    %8 = vector.load %arg3[%c0, %c0_1] : memref<8x16xf32, #tpu.memory_space<vmem>>, vector<8x16xf32>
    %cst = arith.constant dense<0xFF800000> : vector<8xf32>
    %9 = vector.multi_reduction <maximumf>, %8, %cst [1] : vector<8x16xf32> to vector<8xf32>
    %10 = vector.shape_cast %9 : vector<8xf32> to vector<8x1xf32>
    %11 = vector.broadcast %10 : vector<8x1xf32> to vector<8x16xf32>
    %12 = arith.subf %8, %11 : vector<8x16xf32>
    %13 = math.exp %12 : vector<8x16xf32>
    %cst_2 = arith.constant dense<0.000000e+00> : vector<8xf32>
    %14 = vector.multi_reduction <add>, %13, %cst_2 [1] : vector<8x16xf32> to vector<8xf32>
    %15 = vector.shape_cast %14 : vector<8xf32> to vector<8x1xf32>
    %c0_3 = arith.constant 0 : index
    %c0_4 = arith.constant 0 : index
    %16 = vector.load %arg4[%c0_3, %c0_4] : memref<8x1xi32, #tpu.memory_space<vmem>>, vector<8x1xi32>
    %17 = tpu.iota {dimensions = array<i32: 1>} : vector<1x16xi32>
    %18 = vector.broadcast %17 : vector<1x16xi32> to vector<8x16xi32>
    %19 = vector.broadcast %16 : vector<8x1xi32> to vector<8x16xi32>
    %20 = arith.cmpi eq, %18, %19 : vector<8x16xi32>
    %cst_5 = arith.constant 0.000000e+00 : f32
    %21 = vector.broadcast %cst_5 : f32 to vector<8x16xf32>
    %22 = arith.select %20, %12, %21 : vector<8x16xi1>, vector<8x16xf32>
    %cst_6 = arith.constant dense<0.000000e+00> : vector<8xf32>
    %23 = vector.multi_reduction <add>, %22, %cst_6 [1] : vector<8x16xf32> to vector<8xf32>
    %24 = vector.shape_cast %23 : vector<8xf32> to vector<8x1xf32>
    %25 = math.log %15 : vector<8x1xf32>
    %26 = arith.subf %25, %24 : vector<8x1xf32>
    %cst_7 = arith.constant 0.000000e+00 : f32
    %27 = vector.broadcast %cst_7 : f32 to vector<8x1xf32>
    %28 = arith.subf %27, %26 : vector<8x1xf32>
    %29 = math.exp %28 : vector<8x1xf32>
    %cst_8 = arith.constant 1.000000e+00 : f32
    %30 = vector.broadcast %cst_8 : f32 to vector<8x1xf32>
    %31 = arith.subf %30, %29 : vector<8x1xf32>
    %32 = arith.mulf %31, %31 : vector<8x1xf32>
    %33 = arith.mulf %32, %26 : vector<8x1xf32>
    %cst_9 = arith.constant 0.000000e+00 : f32
    %34 = vector.broadcast %cst_9 : f32 to vector<8x1xf32>
    %35 = arith.select %7, %33, %34 : vector<8x1xi1>, vector<8x1xf32>
    %36 = vector.shape_cast %35 : vector<8x1xf32> to vector<1x8x1xf32>
    %cst_10 = arith.constant dense<0.000000e+00> : vector<1xf32>
    %37 = vector.multi_reduction <add>, %36, %cst_10 [1, 2] : vector<1x8x1xf32> to vector<1xf32>
    %38 = vector.shape_cast %37 : vector<1xf32> to vector<1x1x1xf32>
    %39 = vector.extract %38[0, 0, 0] : f32 from vector<1x1x1xf32>
    %c0_11 = arith.constant 0 : index
    %c0_12 = arith.constant 0 : index
    %40 = vector.load %arg5[%c0_11, %c0_12] : memref<8x32xf32, #tpu.memory_space<vmem>>, vector<8x32xf32>
    %c0_13 = arith.constant 0 : index
    %c0_14 = arith.constant 0 : index
    %41 = vector.load %arg6[%c0_13, %c0_14] : memref<8x32xf32, #tpu.memory_space<vmem>>, vector<8x32xf32>
    %42 = arith.mulf %40, %40 : vector<8x32xf32>
    %43 = math.exp %41 : vector<8x32xf32>
    %44 = arith.addf %42, %43 : vector<8x32xf32>
    %45 = arith.subf %44, %41 : vector<8x32xf32>
    %cst_15 = arith.constant 1.000000e+00 : f32
    %46 = vector.broadcast %cst_15 : f32 to vector<8x32xf32>
    %47 = arith.subf %45, %46 : vector<8x32xf32>
    %cst_16 = arith.constant 5.000000e-01 : f32
    %48 = vector.broadcast %cst_16 : f32 to vector<8x32xf32>
    %49 = arith.mulf %47, %48 : vector<8x32xf32>
    %cst_17 = arith.constant dense<0.000000e+00> : vector<8xf32>
    %50 = vector.multi_reduction <add>, %49, %cst_17 [1] : vector<8x32xf32> to vector<8xf32>
    %51 = vector.shape_cast %50 : vector<8xf32> to vector<8x1xf32>
    %cst_18 = arith.constant 0.000000e+00 : f32
    %52 = vector.broadcast %cst_18 : f32 to vector<8x1xf32>
    %53 = arith.select %7, %51, %52 : vector<8x1xi1>, vector<8x1xf32>
    %54 = vector.shape_cast %53 : vector<8x1xf32> to vector<1x8x1xf32>
    %cst_19 = arith.constant dense<0.000000e+00> : vector<1xf32>
    %55 = vector.multi_reduction <add>, %54, %cst_19 [1, 2] : vector<1x8x1xf32> to vector<1xf32>
    %56 = vector.shape_cast %55 : vector<1xf32> to vector<1x1x1xf32>
    %57 = vector.extract %56[0, 0, 0] : f32 from vector<1x1x1xf32>
    %58 = tpu.iota {dimensions = array<i32: 0>} : vector<8x128xi32>
    %c0_i32 = arith.constant 0 : i32
    %59 = vector.broadcast %c0_i32 : i32 to vector<8x128xi32>
    %60 = arith.cmpi eq, %58, %59 : vector<8x128xi32>
    %61 = vector.broadcast %39 : f32 to vector<8x128xf32>
    %62 = vector.broadcast %57 : f32 to vector<8x128xf32>
    %63 = arith.select %60, %61, %62 : vector<8x128xi1>, vector<8x128xf32>
    %c0_i32_20 = arith.constant 0 : i32
    %64 = arith.cmpi eq, %arg1, %c0_i32_20 : i32
    %65 = arith.extui %64 : i1 to i32
    %c0_i32_21 = arith.constant 0 : i32
    %66 = arith.cmpi ne, %65, %c0_i32_21 : i32
    scf.if %66 {
      %c0_24 = arith.constant 0 : index
      %c0_25 = arith.constant 0 : index
      %c0_26 = arith.constant 0 : index
      %70 = vector.load %arg7[%c0_24, %c0_25, %c0_26] : memref<1x8x128xf32, #tpu.memory_space<vmem>>, vector<1x8x128xf32>
      %71 = vector.shape_cast %70 : vector<1x8x128xf32> to vector<8x128xf32>
      %72 = vector.shape_cast %63 : vector<8x128xf32> to vector<1x8x128xf32>
      tpu.vector_store %arg7[%c0_24, %c0_25, %c0_26], %72 {strides = array<i32>} : memref<1x8x128xf32, #tpu.memory_space<vmem>>, vector<1x8x128xf32>,
    } else {
    }
    %c0_i32_22 = arith.constant 0 : i32
    %67 = arith.cmpi sgt, %arg1, %c0_i32_22 : i32
    %68 = arith.extui %67 : i1 to i32
    %c0_i32_23 = arith.constant 0 : i32
    %69 = arith.cmpi ne, %68, %c0_i32_23 : i32
    scf.if %69 {
      %c0_24 = arith.constant 0 : index
      %c0_25 = arith.constant 0 : index
      %c0_26 = arith.constant 0 : index
      %70 = vector.load %arg7[%c0_24, %c0_25, %c0_26] : memref<1x8x128xf32, #tpu.memory_space<vmem>>, vector<1x8x128xf32>
      %71 = vector.shape_cast %70 : vector<1x8x128xf32> to vector<8x128xf32>
      %72 = arith.addf %71, %63 : vector<8x128xf32>
      %c0_27 = arith.constant 0 : index
      %c0_28 = arith.constant 0 : index
      %c0_29 = arith.constant 0 : index
      %73 = vector.load %arg7[%c0_27, %c0_28, %c0_29] : memref<1x8x128xf32, #tpu.memory_space<vmem>>, vector<1x8x128xf32>
      %74 = vector.shape_cast %73 : vector<1x8x128xf32> to vector<8x128xf32>
      %75 = vector.shape_cast %72 : vector<8x128xf32> to vector<1x8x128xf32>
      tpu.vector_store %arg7[%c0_27, %c0_28, %c0_29], %75 {strides = array<i32>} : memref<1x8x128xf32, #tpu.memory_space<vmem>>, vector<1x8x128xf32>,
    } else {
    }
    return
  }
  func.func @transform_0(%arg0: i32, %arg1: i32, %arg2: memref<1xi32, #tpu.memory_space<smem>>) -> (i32, i32) {
    %c1_i32 = arith.constant 1 : i32
    %0 = arith.muli %arg0, %c1_i32 : i32
    %1 = arith.addi %0, %arg1 : i32
    %2 = arith.index_cast %1 : i32 to index
    %3 = memref.load %arg2[%2] : memref<1xi32, #tpu.memory_space<smem>>
    %c0_i32 = arith.constant 0 : i32
    %c0_i32_0 = arith.constant 0 : i32
    return %3, %c0_i32 : i32, i32
  }
  func.func @transform_1(%arg0: i32, %arg1: i32, %arg2: memref<1xi32, #tpu.memory_space<smem>>) -> (i32, i32) {
    %c1_i32 = arith.constant 1 : i32
    %0 = arith.muli %arg0, %c1_i32 : i32
    %1 = arith.addi %0, %arg1 : i32
    %2 = arith.index_cast %1 : i32 to index
    %3 = memref.load %arg2[%2] : memref<1xi32, #tpu.memory_space<smem>>
    %c0_i32 = arith.constant 0 : i32
    %c0_i32_0 = arith.constant 0 : i32
    return %3, %c0_i32 : i32, i32
  }
  func.func @transform_2(%arg0: i32, %arg1: i32, %arg2: memref<1xi32, #tpu.memory_space<smem>>) -> (i32, i32) {
    %c1_i32 = arith.constant 1 : i32
    %0 = arith.muli %arg0, %c1_i32 : i32
    %1 = arith.addi %0, %arg1 : i32
    %2 = arith.index_cast %1 : i32 to index
    %3 = memref.load %arg2[%2] : memref<1xi32, #tpu.memory_space<smem>>
    %c0_i32 = arith.constant 0 : i32
    %c0_i32_0 = arith.constant 0 : i32
    return %3, %c0_i32 : i32, i32
  }
  func.func @transform_3(%arg0: i32, %arg1: i32, %arg2: memref<1xi32, #tpu.memory_space<smem>>) -> (i32, i32) {
    %c1_i32 = arith.constant 1 : i32
    %0 = arith.muli %arg0, %c1_i32 : i32
    %1 = arith.addi %0, %arg1 : i32
    %2 = arith.index_cast %1 : i32 to index
    %3 = memref.load %arg2[%2] : memref<1xi32, #tpu.memory_space<smem>>
    %c0_i32 = arith.constant 0 : i32
    %c0_i32_0 = arith.constant 0 : i32
    return %3, %c0_i32 : i32, i32
  }
  func.func @transform_4(%arg0: i32, %arg1: i32, %arg2: memref<1xi32, #tpu.memory_space<smem>>) -> (i32, i32, i32) {
    %c0_i32 = arith.constant 0 : i32
    %c0_i32_0 = arith.constant 0 : i32
    %c0_i32_1 = arith.constant 0 : i32
    return %arg0, %c0_i32, %c0_i32_0 : i32, i32, i32
  }
}

</mosaic_0001>

<llo_original>
// kernel: tpu_custom_call.1
$region0: #{tpu_custom_call.1}
  #allocation0 [shape = 'u32[]', space=smem, size = 0x4, offset = 0x4, fixed_abs, tag = 'smem constant byte address 0x4 - core index']
  #allocation1 [shape = 'u32[144,128]{1,0:T(1,128)}', space=vmem, size = 0x12000, scoped, tag = 'internal scratch']
  #allocation2 [shape = 's32[1]{0}', space=sflag, size = 0x4, scoped, tag = 'scoped memory for tpu_custom_call.1']
  #allocation3 [shape = 's32[1]{0:T(128)S(6)}', space=smem, size = 0x200, scoped, tag = 'prefetched SMEM operand 0']
  %s0 = inlined_call_operand.<no memory space> [shape: s32[1], index: 0, kind: input, shape index: {}]
  %s1 = inlined_call_operand.vmem [shape: f32[8,16], index: 1, kind: input, shape index: {}]
  %s2 = inlined_call_operand.vmem [shape: s32[8,1], index: 2, kind: input, shape index: {}]
  %s3 = inlined_call_operand.vmem [shape: f32[8,32], index: 3, kind: input, shape index: {}]
  %s4 = inlined_call_operand.vmem [shape: f32[8,32], index: 4, kind: input, shape index: {}]
  %s5 = inlined_call_operand.hbm [shape: f32[1,8,128], index: 5, kind: output, shape index: {}]
  %s6 = sld [smem:[#allocation0]]
  $region34: #{tpu_custom_call.1} parent=0
    _
  %s8 = ssub.s32 1, %s6
  %s9 = scalar_select 0, %s8, %s6
  %10 = sst [smem:[#allocation3]] %s0
  $region1: #{tpu_custom_call.1} parent=0
    #allocation4 [shape = 'u8[4096]{0}', space=vmem, size = 0x1000, scoped, tag = 'output window, operand 0, single buffered']
    #allocation5 [shape = 's32[1]{0}', space=sflag, size = 0x4, scoped, tag = 'scoped memory for tpu_custom_call.1']
    %11 = vsyncpa [#allocation5], 0
    // Predicated region
    $region2: #{tpu_custom_call.1} parent=1 // pred_check
      _
    $region3: #{tpu_custom_call.1} parent=1 // pred_check_branch
      %13 = sbr.rel (0) target = $region5
    $region4: #{tpu_custom_call.1} parent=1 // pred_region
      %s14 = sadd.s32 0, 0
      %s15 = sld [smem:[#allocation3 + %s14]]
      %p16 = scmp.lt.s32.totalorder %s15, 0
      %s17 = scalar_select %p16, %s15, 0
      %s18 = smul.addr %s17, 8
      %s19 = scalar_lea.vmem %s1, %s18
      %s20 = sadd.s32 0, 0
      %s21 = sld [smem:[#allocation3 + %s20]]
    $region5: #{tpu_custom_call.1} parent=1 // pred_fallthru
      _
    // Predicated region
    $region6: #{tpu_custom_call.1} parent=1 // pred_check
      _
    $region7: #{tpu_custom_call.1} parent=1 // pred_check_branch
      %23 = sbr.rel (0) target = $region9
    $region8: #{tpu_custom_call.1} parent=1 // pred_region
      %s24 = sadd.s32 0, 0
      %s25 = sld [smem:[#allocation3 + %s24]]
      %p26 = scmp.lt.s32.totalorder %s25, 0
      %s27 = scalar_select %p26, %s25, 0
      %s28 = smul.addr %s27, 8
      %s29 = scalar_lea.vmem %s2, %s28
      %s30 = sadd.s32 0, 0
      %s31 = sld [smem:[#allocation3 + %s30]]
    $region9: #{tpu_custom_call.1} parent=1 // pred_fallthru
      _
    // Predicated region
    $region10: #{tpu_custom_call.1} parent=1 // pred_check
      _
    $region11: #{tpu_custom_call.1} parent=1 // pred_check_branch
      %33 = sbr.rel (0) target = $region13
    $region12: #{tpu_custom_call.1} parent=1 // pred_region
      %s34 = sadd.s32 0, 0
      %s35 = sld [smem:[#allocation3 + %s34]]
      %p36 = scmp.lt.s32.totalorder %s35, 0
      %s37 = scalar_select %p36, %s35, 0
      %s38 = smul.addr %s37, 8
      %s39 = scalar_lea.vmem %s3, %s38
      %s40 = sadd.s32 0, 0
      %s41 = sld [smem:[#allocation3 + %s40]]
    $region13: #{tpu_custom_call.1} parent=1 // pred_fallthru
      _
    // Predicated region
    $region14: #{tpu_custom_call.1} parent=1 // pred_check
      _
    $region15: #{tpu_custom_call.1} parent=1 // pred_check_branch
      %43 = sbr.rel (0) target = $region17
    $region16: #{tpu_custom_call.1} parent=1 // pred_region
      %s44 = sadd.s32 0, 0
      %s45 = sld [smem:[#allocation3 + %s44]]
      %p46 = scmp.lt.s32.totalorder %s45, 0
      %s47 = scalar_select %p46, %s45, 0
      %s48 = smul.addr %s47, 8
      %s49 = scalar_lea.vmem %s4, %s48
      %s50 = sadd.s32 0, 0
      %s51 = sld [smem:[#allocation3 + %s50]]
    $region17: #{tpu_custom_call.1} parent=1 // pred_fallthru
      _
    %s52 = sadd.s32 0, 0
    %s53 = sld [smem:[#allocation3 + %s52]]
    %p54 = scmp.lt.s32.totalorder %s53, 0
    %s55 = scalar_select %p54, %s53, 0
    %s56 = smul.addr %s55, 8
    %s57 = scalar_lea.vmem %s1, %s56
    %s58 = sadd.s32 0, 0
    %s59 = sld [smem:[#allocation3 + %s58]]
    %p60 = scmp.lt.s32.totalorder %s59, 0
    %s61 = scalar_select %p60, %s59, 0
    %s62 = smul.addr %s61, 8
    %s63 = scalar_lea.vmem %s2, %s62
    %s64 = sadd.s32 0, 0
    %s65 = sld [smem:[#allocation3 + %s64]]
    %p66 = scmp.lt.s32.totalorder %s65, 0
    %s67 = scalar_select %p66, %s65, 0
    %s68 = smul.addr %s67, 8
    %s69 = scalar_lea.vmem %s3, %s68
    %s70 = sadd.s32 0, 0
    %s71 = sld [smem:[#allocation3 + %s70]]
    %p72 = scmp.lt.s32.totalorder %s71, 0
    %s73 = scalar_select %p72, %s71, 0
    %s74 = smul.addr %s73, 8
    %s75 = scalar_lea.vmem %s4, %s74
    %s76 = sadd.s32 0, 0
    %s77 = sld [smem:[#allocation3 + %s76]]
    %p78 = scmp.lt.s32.totalorder %s77, 0
    %s79 = scalar_select %p78, %s77, 0
    %s80 = smul.addr %s79, 8
    %s81 = scalar_lea.vmem %s1, %s80
    %s82 = sadd.s32 0, 0
    %s83 = sld [smem:[#allocation3 + %s82]]
    %s84 = sadd.s32 0, 0
    %s85 = sld [smem:[#allocation3 + %s84]]
    %p86 = scmp.lt.s32.totalorder %s85, 0
    %s87 = scalar_select %p86, %s85, 0
    %s88 = smul.addr %s87, 8
    %s89 = scalar_lea.vmem %s2, %s88
    %s90 = sadd.s32 0, 0
    %s91 = sld [smem:[#allocation3 + %s90]]
    %s92 = sadd.s32 0, 0
    %s93 = sld [smem:[#allocation3 + %s92]]
    %p94 = scmp.lt.s32.totalorder %s93, 0
    %s95 = scalar_select %p94, %s93, 0
    %s96 = smul.addr %s95, 8
    %s97 = scalar_lea.vmem %s3, %s96
    %s98 = sadd.s32 0, 0
    %s99 = sld [smem:[#allocation3 + %s98]]
    %s100 = sadd.s32 0, 0
    %s101 = sld [smem:[#allocation3 + %s100]]
    %p102 = scmp.lt.s32.totalorder %s101, 0
    %s103 = scalar_select %p102, %s101, 0
    %s104 = smul.addr %s103, 8
    %s105 = scalar_lea.vmem %s4, %s104
    %s106 = sadd.s32 0, 0
    %s107 = sld [smem:[#allocation3 + %s106]]
    %s108 = sadd.s32 0, 0
    %s109 = smul.u32 %s108, 8
    %v110 = vlaneseq
    %v111 = vshrl.u32 %v110, 7
    %v112 = vstv %s109
    %v113 = vadd.s32 %v112, %v111
    %vm114 = vcmp.lt.s32.totalorder %v113, 8
    %v115 = vld [vmem:[%s81] sm:$0xff]
    %vm116 = vcmask 130048
    %v117 = vsel %vm116, %v115, -inf
    %118 = vmax.xlane.f32.xlu0 %v117
    %v119 = vpop.xlane.xlu0 %118
    %v120 = vsub.f32 %v115, %v119
    %v121 = vmul.f32 %v120, 1.442695
    %v122 = vpow.pop %v121
    %v123 = vsel %vm116, %v122, 0.0
    %124 = vadd.xlane.f32.xlu0 %v123
    %v125 = vpop.xlane.xlu0 %124
    %v126 = vld [vmem:[%s89] sm:$0xff]
    %v127 = vlaneseq
    %v128 = vand.u32 %v127, 127
    %129 = vset.pattern.permute.xlu0 0
    %130 = vperm.xlu0 %129, %v126
    %v131 = vpop.permute.xlu0 %130
    %vm132 = vcmp.eq.s32.totalorder %v128, %v131
    %v133 = vsel %vm132, %v120, 0.0
    %v134 = vsel %vm116, %v133, 0.0
    %135 = vadd.xlane.f32.xlu0 %v134
    %v136 = vpop.xlane.xlu0 %135
    %v137 = vlog2.pop %v125
    %v138 = vmul.f32 %v137, 0.6931472
    %v139 = vsub.f32 %v138, %v136
    %v140 = vsub.f32 0.0, %v139
    %v141 = vmul.f32 %v140, 1.442695
    %v142 = vpow.pop %v141
    %v143 = vsub.f32 1.0, %v142
    %v144 = vmul.f32 %v143, %v143
    %v145 = vmul.f32 %v144, %v139
    %v146 = vsel %vm114, %v145, 0.0
    %vm147 = vcmask 7168
    %v148 = vsel %vm147, %v146, 0.0
    %149 = vadd.xlane.f32.xlu0 %v148
    %v150 = vpop.xlane.xlu0 %149
    %v151 = vrot.slane %v150, 4
    %v152 = vadd.f32 %v150, %v151
    %v153 = vrot.slane %v152, 2
    %v154 = vadd.f32 %v152, %v153
    %v155 = vrot.slane %v154, 1
    %v156 = vadd.f32 %v154, %v155
    %s157 = vtos %v156
    %v158 = vld [vmem:[%s97] sm:$0xff]
    %v159 = vld [vmem:[%s105] sm:$0xff]
    %v160 = vmul.f32 %v158, %v158
    %v161 = vmul.f32 %v159, 1.442695
    %v162 = vpow.pop %v161
    %v163 = vadd.f32 %v160, %v162
    %v164 = vsub.f32 %v163, %v159
    %v165 = vsub.f32 %v164, 1.0
    %v166 = vmul.f32 %v165, 0.5
    %vm167 = vcmask 261120
    %v168 = vsel %vm167, %v166, 0.0
    %169 = vadd.xlane.f32.xlu0 %v168
    %v170 = vpop.xlane.xlu0 %169
    %v171 = vsel %vm114, %v170, 0.0
    %v172 = vsel %vm147, %v171, 0.0
    %173 = vadd.xlane.f32.xlu0 %v172
    %v174 = vpop.xlane.xlu0 %173
    %v175 = vrot.slane %v174, 4
    %v176 = vadd.f32 %v174, %v175
    %v177 = vrot.slane %v176, 2
    %v178 = vadd.f32 %v176, %v177
    %v179 = vrot.slane %v178, 1
    %v180 = vadd.f32 %v178, %v179
    %s181 = vtos %v180
    %vm182 = vcmp.eq.s32.totalorder %v111, 0
    %v183 = vstv %s157
    %v184 = vstv %s181
    %v185 = vsel %vm182, %v183, %v184
    %p186 = scmp.eq.s32.totalorder 0, 0
    // Predicated region
    $region18: #{tpu_custom_call.1} parent=1 // pred_check
      %p187 = pneg %p186
    $region19: #{tpu_custom_call.1} parent=1 // pred_check_branch
      %189 = sbr.rel (%p187) target = $region21
    $region20: #{tpu_custom_call.1} parent=1 // pred_region
      %190 = vst [vmem:[#allocation4] sm:$0xff] %v185
    $region21: #{tpu_custom_call.1} parent=1 // pred_fallthru
      _
    %p191 = scmp.gt.s32.totalorder 0, 0
    // Predicated region
    $region22: #{tpu_custom_call.1} parent=1 // pred_check
      %p192 = pneg %p191
    $region23: #{tpu_custom_call.1} parent=1 // pred_check_branch
      %194 = sbr.rel (%p192) target = $region25
    $region24: #{tpu_custom_call.1} parent=1 // pred_region
      %v195 = vld [vmem:[#allocation4] sm:$0xff]
      %v196 = vadd.f32 %v195, %v185
      %197 = vst [vmem:[#allocation4] sm:$0xff] %v196
    $region25: #{tpu_custom_call.1} parent=1 // pred_fallthru
      _
    // Predicated region
    $region26: #{tpu_custom_call.1} parent=1 // pred_check
      _
    $region27: #{tpu_custom_call.1} parent=1 // pred_check_branch
      %199 = sbr.rel (0) target = $region29
    $region28: #{tpu_custom_call.1} parent=1 // pred_region
      %s201 = ssub.s32 128, 128
      %202 = vsyncadd [#allocation5], %s201
      %s204 = sshll.u32 [#allocation4], 4
      %s205 = int_to_ptr.vmem [resolvable:$true] %s204
      %207 = dma.vmem_to_hbm [thread:$0]  %s205, 128, %s5, [#allocation5]
    $region29: #{tpu_custom_call.1} parent=1 // pred_fallthru
      _
    // Predicated region
    $region30: #{tpu_custom_call.1} parent=1 // pred_check
      _
    $region31: #{tpu_custom_call.1} parent=1 // pred_check_branch
      %209 = sbr.rel (0) target = $region33
    $region32: #{tpu_custom_call.1} parent=1 // pred_region
      %210 = dma.done [#allocation5], 128
    $region33: #{tpu_custom_call.1} parent=1 // pred_fallthru
      _
    %211 = vsyncpa [#allocation5], 1

</llo_original>
